<compile_context>
chip_gen: v7x
topology: tpu7x:2x2x1
jax: 0.10.0
libtpu: 0.0.40
codegen_flags: <defaults>
</compile_context>

<pallas_src>
import jax
import jax.numpy as jnp
import numpy as np
from jax import lax
from jax.experimental import pallas as pl
from jax.experimental.pallas import tpu as pltpu


def _round_up(x, m):
    return ((x + m - 1) // m) * m


def _round_down(x, m):
    return max(m, (x // m) * m)


def _lora_collapsed_kernel(x_ref, a_t_ref, b_ref, o_ref):
    """One row tile: o = (x @ A_eff) @ B_eff with f32 MXU accumulation.

    a_t_ref holds A_eff^T (rank, in_dim) so it is lane-dense in VMEM; the first
    matmul contracts the lane axis of both operands (transposed-RHS form).
    """
    xa = lax.dot_general(
        x_ref[...], a_t_ref[...],
        dimension_numbers=(((1,), (1,)), ((), ())),
        preferred_element_type=jnp.float32)                  # (tm, rank) f32
    out = jnp.dot(xa.astype(b_ref.dtype), b_ref[...],
                  preferred_element_type=jnp.float32)         # (tm, out_dim) f32
    o_ref[...] = out.astype(o_ref.dtype)


def _vmem_capacity_bytes():
    # 128 MiB on v5e/v6e, 64 MiB per TensorCore on v7x; conservative fallback.
    try:
        cap = int(getattr(pltpu.get_tpu_info(), "vmem_capacity_bytes", 0))
        if cap > 0:
            return cap
    except Exception:
        pass
    return 64 << 20


def _vmem_estimate_bytes(tm, in_dim, out_dim, rank, itemsize):
    """Working-set estimate incl. lane/sublane padding and Mosaic scratch."""
    lane = 128
    sub = 8 if itemsize >= 4 else 16
    in_l = _round_up(in_dim, lane)
    out_l = _round_up(out_dim, lane)
    rank_l = _round_up(rank, lane)
    rank_s = _round_up(rank, sub)
    streamed = 2 * tm * (in_l + out_l) * itemsize        # double-buffered x / out tiles
    weights = 2 * rank_s * (in_l + out_l) * itemsize     # A_eff^T, B_eff (conservative 2x)
    interm = tm * (rank_l + out_l) * 4                   # f32 xa + f32 out temporaries
    return streamed + weights + interm + (2 << 20)       # Mosaic internal scratch


def _collapse_stack(weights, scale):
    """Fold the sequential LoRA stack into a single (A_eff, B_eff) pair.

    h_L = x @ A_eff @ B_eff with
      A_eff = (s*A_0) @ prod_{l=1..L-1} (B_{l-1} @ s*A_l),  B_eff = B_{L-1}.
    Computed in f32 (a few rank x rank matmuls -> negligible cost).
    """
    a0, b_prev = weights[0]
    a_eff = scale * a0.astype(jnp.float32)
    for a_l, b_l in weights[1:]:
        a_eff = a_eff @ (b_prev.astype(jnp.float32) @ (scale * a_l.astype(jnp.float32)))
        b_prev = b_l
    return a_eff, b_prev.astype(jnp.float32)


def lora_stack_apply(x2d, weights, alpha, rank, *, tm=512,
                     compute_dtype=jnp.bfloat16, out_dtype=None):
    """Apply a stack of LoRA layers, h <- scale * (h @ A_l @ B_l), fused.

    x2d:     (M, in_dim_0)
    weights: list of (A_l, B_l); A_0: (in_dim_0, rank), later A_l: (out_dim, rank),
             all B_l: (rank, out_dim).
    """
    M, in_dim0 = x2d.shape
    out_dim = weights[-1][1].shape[1]
    scale = float(alpha) / float(rank)
    compute_dtype = jnp.dtype(compute_dtype)
    out_dtype = jnp.dtype(out_dtype) if out_dtype is not None else compute_dtype
    itemsize = compute_dtype.itemsize

    # Collapse the stack; keep A_eff transposed (lane-dense) and stream
    # everything in compute_dtype (bf16 by default: ~2x HBM-traffic win).
    a_eff, b_eff = _collapse_stack(weights, scale)
    a_eff_t = a_eff.T.astype(compute_dtype)              # (rank, in_dim0)
    b_eff = b_eff.astype(compute_dtype)                  # (rank, out_dim)
    x2d = x2d.astype(compute_dtype)

    # Row-tile size: as large as the generation's VMEM budget allows (amortizes
    # the ~0.35us/grid-step overhead), kept sublane-aligned (8 f32 / 16 bf16).
    min_tm = 8 if itemsize >= 4 else 16
    cap = _vmem_capacity_bytes()
    budget = int(cap * 0.65)
    tm = int(max(min_tm, min(int(tm), _round_up(M, min_tm))))
    tm = _round_down(tm, min_tm)
    while tm > min_tm and _vmem_estimate_bytes(tm, in_dim0, out_dim, rank,
                                               itemsize) > budget:
        tm = _round_down(tm // 2, min_tm)
    # v7x has 2 TensorCores: give the 'parallel' row axis >= 2 grid steps
    # whenever the problem is large enough to split.
    if pl.cdiv(M, tm) < 2 and tm >= 2 * min_tm and M > min_tm:
        tm = _round_down(tm // 2, min_tm)

    # Ragged M: Pallas masks the partial last tile; no jnp.pad / output slice.
    grid = (pl.cdiv(M, tm),)

    est = _vmem_estimate_bytes(tm, in_dim0, out_dim, rank, itemsize)
    # Raise the scoped VMEM limit (defaults: 16 MiB v5e / 32 MiB v6e,v7x) so
    # big double-buffered tiles keep pipelining; leave physical headroom.
    vmem_limit = int(min(max(int(est * 1.25), 32 << 20), cap - (8 << 20)))

    # NOTE: lm_emb_dim should be a multiple of 128 for unmasked lane-dense
    # stores (typical embedding dims satisfy this; small test dims equal the
    # full array dim so they remain valid blocks).
    # TODO(synk): for very large lm_emb_dim add a grid axis over out_dim
    # columns (recomputing the tiny (tm, rank) xa per column tile) instead of
    # shrinking tm.
    # TODO(synk): with VMEM headroom on v7x, try pipeline_mode=pl.Buffered(3)
    # on the x/out specs to hide DMA issue/wait gaps near the HBM roofline.
    out = pl.pallas_call(
        _lora_collapsed_kernel,
        out_shape=jax.ShapeDtypeStruct((M, out_dim), out_dtype),
        grid_spec=pltpu.PrefetchScalarGridSpec(
            num_scalar_prefetch=0,
            grid=grid,
            in_specs=[
                pl.BlockSpec((tm, in_dim0), lambda i: (i, 0)),
                pl.BlockSpec(tuple(a_eff_t.shape), lambda i: (0, 0)),
                pl.BlockSpec(tuple(b_eff.shape), lambda i: (0, 0)),
            ],
            out_specs=pl.BlockSpec((tm, out_dim), lambda i: (i, 0)),
        ),
        compiler_params=pltpu.CompilerParams(
            dimension_semantics=("parallel",),   # row tiles shard across TCs
            vmem_limit_bytes=vmem_limit,
        ),
    )(x2d, a_eff_t, b_eff)
    return out


class LoraAdaptersPallas:
    """JAX/Pallas port of LoraAdapters: a stack of LoRA projection layers."""

    def __init__(self, key, *, n_proj_layers, rank, alpha, lm_emb_dim,
                 mm_emb_dim, param_dtype=jnp.float32):
        self.n_proj_layers = n_proj_layers
        self.rank = rank
        self.alpha = alpha
        self.lm_emb_dim = lm_emb_dim
        self.mm_emb_dim = mm_emb_dim

        std_dev = 1.0 / float(rank) ** 0.5
        self.params = []
        for layer_idx in range(n_proj_layers):
            in_dim = mm_emb_dim if layer_idx == 0 else lm_emb_dim
            key, ka, kb = jax.random.split(key, 3)
            A = jax.random.normal(ka, (in_dim, rank), param_dtype) * std_dev
            # TODO(synk): reference zero-inits B (output identically zero);
            # small random B so the kernel numerics are exercised.
            B = jax.random.normal(kb, (rank, lm_emb_dim), param_dtype) * 0.02
            self.params.append((A, B))

    def __call__(self, x, *, tm=512, compute_dtype=jnp.bfloat16):
        # x: (batch, seq, mm_emb_dim) -> (batch, seq, lm_emb_dim)
        bsz, seq, _ = x.shape
        h = x.reshape(bsz * seq, -1)
        h = lora_stack_apply(h, self.params, self.alpha, self.rank, tm=tm,
                             compute_dtype=compute_dtype)
        return h.reshape(bsz, seq, self.lm_emb_dim)

    def reference(self, x):
        # Exact (float64, per-layer) host reference of the implied stack.
        bsz, seq, _ = x.shape
        h = np.asarray(x, dtype=np.float64).reshape(bsz * seq, -1)
        scale = float(self.alpha) / float(self.rank)
        for (A, B) in self.params:
            h = scale * (h @ np.asarray(A, np.float64) @ np.asarray(B, np.float64))
        return h.reshape(bsz, seq, self.lm_emb_dim)


if __name__ == "__main__":
    key = jax.random.PRNGKey(0)
    key, kx, kp = jax.random.split(key, 3)

    batch, seq = 2, 8
    mm_emb_dim, lm_emb_dim = 32, 32
    rank, alpha, n_proj_layers = 8, 16, 2

    model = LoraAdaptersPallas(
        kp, n_proj_layers=n_proj_layers, rank=rank, alpha=alpha,
        lm_emb_dim=lm_emb_dim, mm_emb_dim=mm_emb_dim)

    x = jax.random.normal(kx, (batch, seq, mm_emb_dim), jnp.float32)

    ref = model.reference(x)
    ref_scale = float(np.max(np.abs(ref))) + 1e-30

    # f32 streaming path: near-exact check vs the per-layer host reference
    # (tolerance covers MXU pass reduction / associativity reordering).
    out_f32 = jax.block_until_ready(model(x, compute_dtype=jnp.float32))
    assert out_f32.shape == (batch, seq, lm_emb_dim)
    err_f32 = float(np.max(np.abs(np.asarray(out_f32, np.float64) - ref)))
    assert err_f32 <= 2e-2 * ref_scale + 1e-4, f"f32 mismatch: {err_f32}"

    # bf16 streaming path (production default): bf16-tolerance check.
    out_bf16 = jax.block_until_ready(model(x))
    assert out_bf16.shape == (batch, seq, lm_emb_dim)
    err_bf16 = float(np.max(np.abs(np.asarray(out_bf16, np.float64) - ref)))
    assert err_bf16 <= 1e-1 * ref_scale + 1e-3, f"bf16 mismatch: {err_bf16}"

    print("KERNEL_OK")
</pallas_src>

<mosaic_0001>
module attributes {stable_mosaic.version = 11 : i64} {
  func.func @_lora_collapsed_kernel(%arg0: i32, %arg1: memref<8x32xf32, #tpu.memory_space<vmem>>, %arg2: memref<8x32xf32, #tpu.memory_space<vmem>>, %arg3: memref<8x32xf32, #tpu.memory_space<vmem>>, %arg4: memref<8x32xf32, #tpu.memory_space<vmem>>) attributes {dimension_semantics = [#tpu.dimension_semantics<parallel>], iteration_bounds = array<i64: 2>, scalar_prefetch = 0 : i64, scratch_operands = 0 : i64, tpu.core_type = #tpu.core_type<tc>, window_params = [{transform_indices = @transform_0, window_bounds = array<i64: 8, 32>}, {pipeline_mode = #tpu.pipeline_mode<synchronous>, transform_indices = @transform_1, window_bounds = array<i64: 8, 32>}, {pipeline_mode = #tpu.pipeline_mode<synchronous>, transform_indices = @transform_2, window_bounds = array<i64: 8, 32>}, {transform_indices = @transform_3, window_bounds = array<i64: 8, 32>}]} {
    %c0 = arith.constant 0 : index
    %c0_0 = arith.constant 0 : index
    %0 = vector.load %arg1[%c0, %c0_0] : memref<8x32xf32, #tpu.memory_space<vmem>>, vector<8x32xf32>
    %c0_1 = arith.constant 0 : index
    %c0_2 = arith.constant 0 : index
    %1 = vector.load %arg2[%c0_1, %c0_2] : memref<8x32xf32, #tpu.memory_space<vmem>>, vector<8x32xf32>
    %cst = arith.constant dense<0.000000e+00> : vector<8x8xf32>
    %2 = tpu.matmul %0, %1, %cst {dimension_numbers = #tpu.dot_dimension_numbers<[1], [1], [0], [0], [0, 0, 1, 0], [], []>} : vector<8x32xf32>, vector<8x32xf32>, vector<8x8xf32> -> vector<8x8xf32>
    %c0_3 = arith.constant 0 : index
    %c0_4 = arith.constant 0 : index
    %3 = vector.load %arg3[%c0_3, %c0_4] : memref<8x32xf32, #tpu.memory_space<vmem>>, vector<8x32xf32>
    %cst_5 = arith.constant dense<0.000000e+00> : vector<8x32xf32>
    %4 = tpu.matmul %2, %3, %cst_5 {dimension_numbers = #tpu.dot_dimension_numbers<[1], [0], [0], [1], [0, 0, 1, 1], [], []>} : vector<8x8xf32>, vector<8x32xf32>, vector<8x32xf32> -> vector<8x32xf32>
    %c0_6 = arith.constant 0 : index
    %c0_7 = arith.constant 0 : index
    %5 = vector.load %arg4[%c0_6, %c0_7] : memref<8x32xf32, #tpu.memory_space<vmem>>, vector<8x32xf32>
    tpu.vector_store %arg4[%c0_6, %c0_7], %4 {strides = array<i32>} : memref<8x32xf32, #tpu.memory_space<vmem>>, vector<8x32xf32>,
    return
  }
  func.func @transform_0(%arg0: i32) -> (i32, i32) {
    %c0_i32 = arith.constant 0 : i32
    %c0_i32_0 = arith.constant 0 : i32
    return %arg0, %c0_i32 : i32, i32
  }
  func.func @transform_1(%arg0: i32) -> (i32, i32) {
    %c0_i32 = arith.constant 0 : i32
    %c0_i32_0 = arith.constant 0 : i32
    %c0_i32_1 = arith.constant 0 : i32
    return %c0_i32, %c0_i32_0 : i32, i32
  }
  func.func @transform_2(%arg0: i32) -> (i32, i32) {
    %c0_i32 = arith.constant 0 : i32
    %c0_i32_0 = arith.constant 0 : i32
    %c0_i32_1 = arith.constant 0 : i32
    return %c0_i32, %c0_i32_0 : i32, i32
  }
  func.func @transform_3(%arg0: i32) -> (i32, i32) {
    %c0_i32 = arith.constant 0 : i32
    %c0_i32_0 = arith.constant 0 : i32
    return %arg0, %c0_i32 : i32, i32
  }
}

</mosaic_0001>

<llo_original>
// kernel: tpu_custom_call.1
$region0: #{tpu_custom_call.1}
  #allocation0 [shape = 'u32[]', space=smem, size = 0x4, offset = 0x4, fixed_abs, tag = 'smem constant byte address 0x4 - core index']
  #allocation1 [shape = 'u32[144,128]{1,0:T(1,128)}', space=vmem, size = 0x12000, scoped, tag = 'internal scratch']
  %s0 = inlined_call_operand.hbm [shape: f32[16,32], index: 0, kind: input, shape index: {}]
  %s1 = inlined_call_operand.hbm [shape: f32[8,32], index: 1, kind: input, shape index: {}]
  %s2 = inlined_call_operand.hbm [shape: f32[8,32], index: 2, kind: input, shape index: {}]
  %s3 = inlined_call_operand.hbm [shape: f32[16,32], index: 3, kind: output, shape index: {}]
  %s4 = sld [smem:[#allocation0]]
  $region57: #{tpu_custom_call.1} parent=0
    _
  %s6 = ssub.s32 1, %s4
  %s7 = scalar_select 0, %s6, %s4
  $region1: #{tpu_custom_call.1} parent=0
    #allocation2 [shape = 'u8[8192]{0}', space=vmem, size = 0x2000, scoped, tag = 'input window, operand 0']
    #allocation3 [shape = 's32[2]{0}', space=sflag, size = 0x8, scoped, tag = 'scoped memory for tpu_custom_call.1']
    #allocation4 [shape = 's32[2]{0}', space=sflag, size = 0x8, scoped, tag = 'scoped memory for tpu_custom_call.1']
    #allocation5 [shape = 'u8[4096]{0}', space=vmem, size = 0x1000, scoped, tag = 'input window, operand 1, single buffered']
    #allocation6 [shape = 's32[1]{0}', space=sflag, size = 0x4, scoped, tag = 'scoped memory for tpu_custom_call.1']
    #allocation7 [shape = 'u8[4096]{0}', space=vmem, size = 0x1000, scoped, tag = 'input window, operand 2, single buffered']
    #allocation8 [shape = 'u8[8192]{0}', space=vmem, size = 0x2000, scoped, tag = 'output window, operand 0']
    %8 = vsyncpa [#allocation3], 0
    %s9 = scalar_lea.sflag [#allocation3], 1
    %10 = vsyncpa %s9, 0
    %11 = vsyncpa [#allocation6], 0
    %12 = vsyncpa [#allocation4], 0
    %s13 = scalar_lea.sflag [#allocation4], 1
    %14 = vsyncpa %s13, 0
    loop: start=0, step=1, limit=4
    $region2: #{tpu_custom_call.1} parent=1 // loop_pre_header
      _
    $region3: #{tpu_custom_call.1} parent=1 // loop_header
      %s16 = sphi 0, %s20
      %p17 = scmp.ge.s32.totalorder %s16, 4
      %s26 = sphi 0, %s28
      %s29 = sphi 0, %s26
      %s30 = sphi 0, %s29
      %s46 = sphi 0, %s30
      %s50 = sphi 0, %s50
      %s52 = sphi 0, %s50
      %s53 = sphi 0, %s52
      %s67 = sphi 0, %s53
      %s71 = sphi 0, %s71
      %s73 = sphi 0, %s71
      %s74 = sphi 0, %s73
      %s88 = sphi 0, %s74
      %s94 = sphi 0, %s96
      %s97 = sphi 0, %s94
      %s98 = sphi 0, %s97
      %s114 = sphi 0, %s98
    $region4: #{tpu_custom_call.1} parent=1 // loop_header_branch
      %19 = sbr.rel (%p17) target = $region8
    $region5: #{tpu_custom_call.1} parent=1 // loop_body
      %s21 = ssub.s32 %s16, 1
      %s22 = ssub.s32 %s16, 2
      %s23 = sadd.s32 %s16, 1
      %s24 = ssub.s32 %s16, %s23
      %p25 = scmp.eq.s32.totalorder %s24, 0
      %s27 = sadd.s32 %s26, 1
      %s28 = scalar_select %p25, %s26, %s27
      %p31 = pneg %p25
      %p32 = scmp.eq.s32.totalorder %s16, 1
      %p33 = por %p31, %p32
      %p34 = scmp.ne.s32.totalorder %s26, %s29
      %p35 = scmp.eq.s32.totalorder %s16, 0
      %p36 = por %p34, %p35
      %p37 = scmp.ne.s32.totalorder %s26, %s29
      %p38 = scmp.eq.s32.totalorder %s21, 1
      %p39 = por %p37, %p38
      %p40 = scmp.ne.s32.totalorder %s29, %s30
      %p41 = scmp.eq.s32.totalorder %s21, 0
      %p42 = por %p40, %p41
      %p43 = scmp.ne.s32.totalorder %s29, %s30
      %p44 = scmp.eq.s32.totalorder %s22, 1
      %p45 = por %p43, %p44
      %p47 = scmp.ne.s32.totalorder %s30, %s46
      %p48 = scmp.eq.s32.totalorder %s22, 0
      %p49 = por %p47, %p48
      %s51 = sadd.s32 %s50, 1
      %p54 = scmp.eq.s32.totalorder %s16, 1
      %p55 = scmp.ne.s32.totalorder %s50, %s52
      %p56 = scmp.eq.s32.totalorder %s16, 0
      %p57 = por %p55, %p56
      %p58 = scmp.ne.s32.totalorder %s50, %s52
      %p59 = scmp.eq.s32.totalorder %s21, 1
      %p60 = por %p58, %p59
      %p61 = scmp.ne.s32.totalorder %s52, %s53
      %p62 = scmp.eq.s32.totalorder %s21, 0
      %p63 = por %p61, %p62
      %p64 = scmp.ne.s32.totalorder %s52, %s53
      %p65 = scmp.eq.s32.totalorder %s22, 1
      %p66 = por %p64, %p65
      %p68 = scmp.ne.s32.totalorder %s53, %s67
      %p69 = scmp.eq.s32.totalorder %s22, 0
      %p70 = por %p68, %p69
      %s72 = sadd.s32 %s71, 1
      %p75 = scmp.eq.s32.totalorder %s16, 1
      %p76 = scmp.ne.s32.totalorder %s71, %s73
      %p77 = scmp.eq.s32.totalorder %s16, 0
      %p78 = por %p76, %p77
      %p79 = scmp.ne.s32.totalorder %s71, %s73
      %p80 = scmp.eq.s32.totalorder %s21, 1
      %p81 = por %p79, %p80
      %p82 = scmp.ne.s32.totalorder %s73, %s74
      %p83 = scmp.eq.s32.totalorder %s21, 0
      %p84 = por %p82, %p83
      %p85 = scmp.ne.s32.totalorder %s73, %s74
      %p86 = scmp.eq.s32.totalorder %s22, 1
      %p87 = por %p85, %p86
      %p89 = scmp.ne.s32.totalorder %s74, %s88
      %p90 = scmp.eq.s32.totalorder %s22, 0
      %p91 = por %p89, %p90
      %s92 = ssub.s32 %s16, %s23
      %p93 = scmp.eq.s32.totalorder %s92, 0
      %s95 = sadd.s32 %s94, 1
      %s96 = scalar_select %p93, %s94, %s95
      %p99 = pneg %p93
      %p100 = scmp.eq.s32.totalorder %s16, 1
      %p101 = por %p99, %p100
      %p102 = scmp.ne.s32.totalorder %s94, %s97
      %p103 = scmp.eq.s32.totalorder %s16, 0
      %p104 = por %p102, %p103
      %p105 = scmp.ne.s32.totalorder %s94, %s97
      %p106 = scmp.eq.s32.totalorder %s21, 1
      %p107 = por %p105, %p106
      %p108 = scmp.ne.s32.totalorder %s97, %s98
      %p109 = scmp.eq.s32.totalorder %s21, 0
      %p110 = por %p108, %p109
      %p111 = scmp.ne.s32.totalorder %s97, %s98
      %p112 = scmp.eq.s32.totalorder %s22, 1
      %p113 = por %p111, %p112
      %p115 = scmp.ne.s32.totalorder %s98, %s114
      %p116 = scmp.eq.s32.totalorder %s22, 0
      %p117 = por %p115, %p116
      %p118 = scmp.le.s32.totalorder 1, %s16
      %p119 = scmp.lt.s32.totalorder %s16, 3
      %p120 = pnand %p118, %p119
      %p121 = pneg %p120
      // Predicated region
      $region9: #{tpu_custom_call.1} parent=5 // pred_check
        _
      $region10: #{tpu_custom_call.1} parent=5 // pred_check_branch
        %123 = sbr.rel (%p120) target = $region12
      $region11: #{tpu_custom_call.1} parent=5 // pred_region
        %s124 = ssub.s32 %s16, 1
        // Predicated region
        $region13: #{tpu_custom_call.1} parent=11 // pred_check
          %p125 = pneg %p63
        $region14: #{tpu_custom_call.1} parent=11 // pred_check_branch
          %127 = sbr.rel (%p125) target = $region16
        $region15: #{tpu_custom_call.1} parent=11 // pred_region
          %s129 = ssub.s32 128, 128
          %130 = vsyncadd [#allocation6], %s129
          %s132 = sshll.u32 [#allocation5], 4
          %s133 = int_to_ptr.vmem [resolvable:$true] %s132
          %135 = dma.hbm_to_vmem [thread:$0]  %s1, 128, %s133, [#allocation6]
        $region16: #{tpu_custom_call.1} parent=11 // pred_fallthru
          _
        // Predicated region
        $region17: #{tpu_custom_call.1} parent=11 // pred_check
          %p136 = pneg %p84
        $region18: #{tpu_custom_call.1} parent=11 // pred_check_branch
          %138 = sbr.rel (%p136) target = $region20
        $region19: #{tpu_custom_call.1} parent=11 // pred_region
          %s140 = ssub.s32 128, 128
          %141 = vsyncadd [#allocation6], %s140
          %s143 = sshll.u32 [#allocation7], 4
          %s144 = int_to_ptr.vmem [resolvable:$true] %s143
          %146 = dma.hbm_to_vmem [thread:$0]  %s2, 128, %s144, [#allocation6]
        $region20: #{tpu_custom_call.1} parent=11 // pred_fallthru
          _
      $region12: #{tpu_custom_call.1} parent=5 // pred_fallthru
        _
      %p147 = scmp.lt.s32.totalorder %s16, 2
      // Predicated region
      $region21: #{tpu_custom_call.1} parent=5 // pred_check
        %p148 = pneg %p147
      $region22: #{tpu_custom_call.1} parent=5 // pred_check_branch
        %150 = sbr.rel (%p148) target = $region24
      $region23: #{tpu_custom_call.1} parent=5 // pred_region
        // Predicated region
        $region25: #{tpu_custom_call.1} parent=23 // pred_check
          %p151 = pneg %p36
        $region26: #{tpu_custom_call.1} parent=23 // pred_check_branch
          %153 = sbr.rel (%p151) target = $region28
        $region27: #{tpu_custom_call.1} parent=23 // pred_region
          %s154 = sand.u32 %s26, 1
          %s155 = scalar_lea.sflag [#allocation3], %s154
          %s156 = sand.u32 %s26, 1
          %s157 = smul.addr %s156, 8
          %s158 = scalar_lea.vmem [#allocation2], %s157
          %s160 = ssub.s32 128, 128
          %161 = vsyncadd %s155, %s160
          %s162 = smul.addr %s16, 128
          %s163 = scalar_lea.hbm %s0, %s162
          %s165 = sshll.u32 %s158, 4
          %s166 = int_to_ptr.vmem [resolvable:$true] %s165
          %168 = dma.hbm_to_vmem [thread:$0]  %s163, 128, %s166, %s155
        $region28: #{tpu_custom_call.1} parent=23 // pred_fallthru
          _
      $region24: #{tpu_custom_call.1} parent=5 // pred_fallthru
        _
      %p169 = scmp.le.s32.totalorder 1, %s16
      %p170 = scmp.lt.s32.totalorder %s16, 3
      %p171 = pnand %p169, %p170
      %p172 = pneg %p171
      // Predicated region
      $region29: #{tpu_custom_call.1} parent=5 // pred_check
        _
      $region30: #{tpu_custom_call.1} parent=5 // pred_check_branch
        %174 = sbr.rel (%p171) target = $region32
      $region31: #{tpu_custom_call.1} parent=5 // pred_region
        %s175 = ssub.s32 %s16, 1
        %s176 = sand.u32 %s29, 1
        %s177 = scalar_lea.sflag [#allocation3], %s176
        %s178 = sand.u32 %s29, 1
        %s179 = smul.addr %s178, 8
        %s180 = scalar_lea.vmem [#allocation2], %s179
        // Predicated region
        $region33: #{tpu_custom_call.1} parent=31 // pred_check
          %p181 = pneg %p42
        $region34: #{tpu_custom_call.1} parent=31 // pred_check_branch
          %183 = sbr.rel (%p181) target = $region36
        $region35: #{tpu_custom_call.1} parent=31 // pred_region
          %184 = dma.done %s177, 128
        $region36: #{tpu_custom_call.1} parent=31 // pred_fallthru
          _
        // Predicated region
        $region37: #{tpu_custom_call.1} parent=31 // pred_check
          %p185 = pneg %p63
        $region38: #{tpu_custom_call.1} parent=31 // pred_check_branch
          %187 = sbr.rel (%p185) target = $region40
        $region39: #{tpu_custom_call.1} parent=31 // pred_region
          %188 = dma.done [#allocation6], 128
        $region40: #{tpu_custom_call.1} parent=31 // pred_fallthru
          _
        // Predicated region
        $region41: #{tpu_custom_call.1} parent=31 // pred_check
          %p189 = pneg %p84
        $region42: #{tpu_custom_call.1} parent=31 // pred_check_branch
          %191 = sbr.rel (%p189) target = $region44
        $region43: #{tpu_custom_call.1} parent=31 // pred_region
          %192 = dma.done [#allocation6], 128
        $region44: #{tpu_custom_call.1} parent=31 // pred_fallthru
          _
        %s193 = sand.u32 %s29, 1
        %s194 = scalar_lea.sflag [#allocation3], %s193
        %s195 = sand.u32 %s29, 1
        %s196 = smul.addr %s195, 8
        %s197 = scalar_lea.vmem [#allocation2], %s196
        %p198 = pneg %p42
        %p199 = pneg %p39
        %p200 = pneg %p63
        %p201 = pneg %p60
        %p202 = pneg %p84
        %p203 = pneg %p81
        %p204 = pneg %p110
        %p205 = pneg %p107
        %s206 = sand.u32 %s97, 1
        %s207 = scalar_lea.sflag [#allocation4], %s206
        %s208 = sand.u32 %s97, 1
        %s209 = smul.addr %s208, 8
        %s210 = scalar_lea.vmem [#allocation8], %s209
        %v211 = vld [vmem:[%s180] sm:$0xff]
        %v212 = vld [vmem:[#allocation5] sm:$0xff]
        %vm213 = vcmask 261120
        %v215 = vsel %vm213, %v211, 0
        %v218 = vsel %vm213, %v212, 0
        %220 = vmatprep.subr.mxu0 0.0
        %221 = vmatpush1.xpose.msra.mxu0 %v218
        %222 = vmatprep.subr.mxu0 0.0
        %223 = vmatpush1.xpose.msra.mxu0 0.0
        %224 = vmatprep.subr.mxu0 0.0
        %225 = vmatpush1.xpose.msra.mxu0 0.0
        %226 = vmatprep.subr.mxu0 0.0
        %227 = vmatpush1.xpose.msra.mxu0 0.0
        %228 = vmatprep.subr.mxu0 0.0
        %229 = vmatpush1.xpose.msra.mxu0 0.0
        %230 = vmatprep.subr.mxu0 0.0
        %231 = vmatpush1.xpose.msra.mxu0 0.0
        %232 = vmatprep.subr.mxu0 0.0
        %233 = vmatpush1.xpose.msra.mxu0 0.0
        %234 = vmatprep.subr.mxu0 0.0
        %235 = vmatpush1.xpose.msra.mxu0 0.0
        %236 = vmatprep.subr.mxu0 0.0
        %237 = vmatpush1.xpose.msra.mxu0 0.0
        %238 = vmatprep.subr.mxu0 0.0
        %239 = vmatpush1.xpose.msra.mxu0 0.0
        %240 = vmatprep.subr.mxu0 0.0
        %241 = vmatpush1.xpose.msra.mxu0 0.0
        %242 = vmatprep.subr.mxu0 0.0
        %243 = vmatpush1.xpose.msra.mxu0 0.0
        %244 = vmatprep.subr.mxu0 0.0
        %245 = vmatpush1.xpose.msra.mxu0 0.0
        %246 = vmatprep.subr.mxu0 0.0
        %247 = vmatpush1.xpose.msra.mxu0 0.0
        %248 = vmatprep.subr.mxu0 0.0
        %249 = vmatpush1.xpose.msra.mxu0 0.0
        %250 = vmatprep.subr.mxu0 0.0
        %251 = vmatpush1.xpose.msra.mxu0 0.0
        %252 = vmatprep.subr.mxu0 0.0
        %253 = vmatpush1.xpose.msra.mxu0 0.0
        %254 = vmatprep.subr.mxu0 0.0
        %255 = vmatpush1.xpose.msra.mxu0 0.0
        %256 = vmatprep.subr.mxu0 0.0
        %257 = vmatpush1.xpose.msra.mxu0 0.0
        %258 = vmatprep.subr.mxu0 0.0
        %259 = vmatpush1.xpose.msra.mxu0 0.0
        %260 = vmatprep.subr.mxu0 0.0
        %261 = vmatpush1.xpose.msra.mxu0 0.0
        %262 = vmatprep.subr.mxu0 0.0
        %263 = vmatpush1.xpose.msra.mxu0 0.0
        %264 = vmatprep.subr.mxu0 0.0
        %265 = vmatpush1.xpose.msra.mxu0 0.0
        %266 = vmatprep.subr.mxu0 0.0
        %267 = vmatpush1.xpose.msra.mxu0 0.0
        %268 = vmatprep.subr.mxu0 0.0
        %269 = vmatpush1.xpose.msra.mxu0 0.0
        %270 = vmatprep.subr.mxu0 0.0
        %271 = vmatpush1.xpose.msra.mxu0 0.0
        %272 = vmatprep.subr.mxu0 0.0
        %273 = vmatpush1.xpose.msra.mxu0 0.0
        %274 = vmatprep.subr.mxu0 0.0
        %275 = vmatpush1.xpose.msra.mxu0 0.0
        %276 = vmatprep.subr.mxu0 0.0
        %277 = vmatpush1.xpose.msra.mxu0 0.0
        %278 = vmatprep.subr.mxu0 0.0
        %279 = vmatpush1.xpose.msra.mxu0 0.0
        %280 = vmatprep.subr.mxu0 0.0
        %281 = vmatpush1.xpose.msra.mxu0 0.0
        %282 = vmatprep.subr.mxu0 0.0
        %283 = vmatpush1.xpose.msra.mxu0 0.0
        %284 = vmatprep.mubr.f32.mxu0 0.0
        %285 = vmatmul.mubr.f32.gmra.mrb[0].mxu0 %v215
        %v286 = vpop.f32.mrb[0].mxu0
        %v287 = vadd.f32 0.0, %v286
        %v288 = vpop.f32.mrb[0].mxu0
        %289 = vdwg.mxu0
        %v290 = vld [vmem:[#allocation7] sm:$0xff]
        %vm291 = vcmask 64512
        %v293 = vsel %vm291, %v287, 0
        %295 = vmatprep.subr.mxu0 0.0
        %296 = vmatpush1.msra.mxu0 %v290
        %297 = vmatprep.subr.mxu0 0.0
        %298 = vmatpush1.msra.mxu0 0.0
        %299 = vmatprep.subr.mxu0 0.0
        %300 = vmatpush1.msra.mxu0 0.0
        %301 = vmatprep.subr.mxu0 0.0
        %302 = vmatpush1.msra.mxu0 0.0
        %303 = vmatprep.subr.mxu0 0.0
        %304 = vmatpush1.msra.mxu0 0.0
        %305 = vmatprep.subr.mxu0 0.0
        %306 = vmatpush1.msra.mxu0 0.0
        %307 = vmatprep.subr.mxu0 0.0
        %308 = vmatpush1.msra.mxu0 0.0
        %309 = vmatprep.subr.mxu0 0.0
        %310 = vmatpush1.msra.mxu0 0.0
        %311 = vmatprep.subr.mxu0 0.0
        %312 = vmatpush1.msra.mxu0 0.0
        %313 = vmatprep.subr.mxu0 0.0
        %314 = vmatpush1.msra.mxu0 0.0
        %315 = vmatprep.subr.mxu0 0.0
        %316 = vmatpush1.msra.mxu0 0.0
        %317 = vmatprep.subr.mxu0 0.0
        %318 = vmatpush1.msra.mxu0 0.0
        %319 = vmatprep.subr.mxu0 0.0
        %320 = vmatpush1.msra.mxu0 0.0
        %321 = vmatprep.subr.mxu0 0.0
        %322 = vmatpush1.msra.mxu0 0.0
        %323 = vmatprep.subr.mxu0 0.0
        %324 = vmatpush1.msra.mxu0 0.0
        %325 = vmatprep.subr.mxu0 0.0
        %326 = vmatpush1.msra.mxu0 0.0
        %327 = vmatprep.subr.mxu0 0.0
        %328 = vmatpush1.msra.mxu0 0.0
        %329 = vmatprep.subr.mxu0 0.0
        %330 = vmatpush1.msra.mxu0 0.0
        %331 = vmatprep.subr.mxu0 0.0
        %332 = vmatpush1.msra.mxu0 0.0
        %333 = vmatprep.subr.mxu0 0.0
        %334 = vmatpush1.msra.mxu0 0.0
        %335 = vmatprep.subr.mxu0 0.0
        %336 = vmatpush1.msra.mxu0 0.0
        %337 = vmatprep.subr.mxu0 0.0
        %338 = vmatpush1.msra.mxu0 0.0
        %339 = vmatprep.subr.mxu0 0.0
        %340 = vmatpush1.msra.mxu0 0.0
        %341 = vmatprep.subr.mxu0 0.0
        %342 = vmatpush1.msra.mxu0 0.0
        %343 = vmatprep.subr.mxu0 0.0
        %344 = vmatpush1.msra.mxu0 0.0
        %345 = vmatprep.subr.mxu0 0.0
        %346 = vmatpush1.msra.mxu0 0.0
        %347 = vmatprep.subr.mxu0 0.0
        %348 = vmatpush1.msra.mxu0 0.0
        %349 = vmatprep.subr.mxu0 0.0
        %350 = vmatpush1.msra.mxu0 0.0
        %351 = vmatprep.subr.mxu0 0.0
        %352 = vmatpush1.msra.mxu0 0.0
        %353 = vmatprep.subr.mxu0 0.0
        %354 = vmatpush1.msra.mxu0 0.0
        %355 = vmatprep.subr.mxu0 0.0
        %356 = vmatpush1.msra.mxu0 0.0
        %357 = vmatprep.subr.mxu0 0.0
        %358 = vmatpush1.msra.mxu0 0.0
        %359 = vmatprep.mubr.f32.mxu0 0.0
        %360 = vmatmul.mubr.f32.gmra.mrb[0].mxu0 %v293
        %v361 = vpop.f32.mrb[0].mxu0
        %v362 = vadd.f32 0.0, %v361
        %v363 = vpop.f32.mrb[0].mxu0
        %364 = vdwg.mxu0
        %365 = vst.msk [vmem:[%s210] sm:$0xff] %vm213, %v362
        %s366 = sand.u32 %s97, 1
        %s367 = scalar_lea.sflag [#allocation4], %s366
        %s368 = sand.u32 %s97, 1
        %s369 = smul.addr %s368, 8
        %s370 = scalar_lea.vmem [#allocation8], %s369
        // Predicated region
        $region45: #{tpu_custom_call.1} parent=31 // pred_check
          %p371 = pneg %p107
        $region46: #{tpu_custom_call.1} parent=31 // pred_check_branch
          %373 = sbr.rel (%p371) target = $region48
        $region47: #{tpu_custom_call.1} parent=31 // pred_region
          %s375 = ssub.s32 128, 128
          %376 = vsyncadd %s367, %s375
          %s377 = smul.addr %s21, 128
          %s378 = scalar_lea.hbm %s3, %s377
          %s380 = sshll.u32 %s370, 4
          %s381 = int_to_ptr.vmem [resolvable:$true] %s380
          %383 = dma.vmem_to_hbm [thread:$0]  %s381, 128, %s378, %s367
        $region48: #{tpu_custom_call.1} parent=31 // pred_fallthru
          _
      $region32: #{tpu_custom_call.1} parent=5 // pred_fallthru
        _
      %p384 = scmp.le.s32.totalorder 2, %s16
      // Predicated region
      $region49: #{tpu_custom_call.1} parent=5 // pred_check
        %p385 = pneg %p384
      $region50: #{tpu_custom_call.1} parent=5 // pred_check_branch
        %387 = sbr.rel (%p385) target = $region52
      $region51: #{tpu_custom_call.1} parent=5 // pred_region
        %s388 = ssub.s32 %s16, 2
        // Predicated region
        $region53: #{tpu_custom_call.1} parent=51 // pred_check
          %p389 = pneg %p113
        $region54: #{tpu_custom_call.1} parent=51 // pred_check_branch
          %391 = sbr.rel (%p389) target = $region56
        $region55: #{tpu_custom_call.1} parent=51 // pred_region
          %s392 = sand.u32 %s98, 1
          %s393 = scalar_lea.sflag [#allocation4], %s392
          %s394 = sand.u32 %s98, 1
          %s395 = smul.addr %s394, 8
          %s396 = scalar_lea.vmem [#allocation8], %s395
          %397 = dma.done %s393, 128
        $region56: #{tpu_custom_call.1} parent=51 // pred_fallthru
          _
      $region52: #{tpu_custom_call.1} parent=5 // pred_fallthru
        _
    $region6: #{tpu_custom_call.1} parent=1 // loop_footer
      %s20 = sadd.s32 1, %s16
    $region7: #{tpu_custom_call.1} parent=1 // loop_footer_branch
      %15 = sbr.rel target = $region3
    $region8: #{tpu_custom_call.1} parent=1 // loop_exit
      _
    %398 = vsyncpa [#allocation3], 1
    %s399 = scalar_lea.sflag [#allocation3], 1
    %400 = vsyncpa %s399, 1
    %401 = vsyncpa [#allocation6], 1
    %402 = vsyncpa [#allocation4], 1
    %s403 = scalar_lea.sflag [#allocation4], 1
    %404 = vsyncpa %s403, 1

</llo_original>
